<compile_context>
chip_gen: v5e
topology: v5e:2x2
jax: 0.10.0
libtpu: 0.0.40
codegen_flags: <defaults>
</compile_context>

<pallas_src>
import functools

import jax
import jax.numpy as jnp
import numpy as np
from jax.experimental import pallas as pl
from jax.experimental.pallas import tpu as pltpu


def _fmlstm_kernel(combined_ref, cell_ref,
                   w_big_ref, b_big_ref, w_first_ref,
                   ln_g_ref, ln_b_ref, w_out_ref, b_out_ref,
                   out_ref, hid_ref, hc1_ref, dval_ref,
                   *, ln_eps, mm_dtype):
    H = hid_ref.shape[-1]
    K = cell_ref.shape[0]
    NB = dval_ref.shape[0]

    combined = combined_ref[...]                      # (B, I+H+NB*H) f32
    cell_t = cell_ref[...]                            # (K, B, H) f32

    # One fused MXU pass.
    # Columns = [c | i | o | f_0 | ... | f_{NB-1}], each H wide.
    gates = jnp.dot(combined.astype(mm_dtype), w_big_ref[...].astype(mm_dtype),
                    preferred_element_type=jnp.float32) + b_big_ref[...]

    c_tilde = jnp.tanh(gates[:, 0:H])
    i_gate = jax.nn.sigmoid(gates[:, H:2 * H])
    o_gate = jax.nn.sigmoid(gates[:, 2 * H:3 * H])
    second = c_tilde * i_gate                         # (B, H)

    ln_g = ln_g_ref[...]                              # (1, H)
    ln_b = ln_b_ref[...]                              # (1, H)

    first_sum = jnp.zeros_like(second)
    for n in range(NB):                               # NB is static & small
        # d_values_n = sigmoid(f_gate_n([sample, hidden, d0_n])) * 0.5.
        # The whole pre-activation (sample, hidden AND d0_n) is already inside
        # `gates` thanks to the block-structured fused weight.
        d_n = jax.nn.sigmoid(gates[:, (3 + n) * H:(4 + n) * H]) * 0.5   # (B, H)
        dval_ref[n, :, :] = d_n

        # first = einsum('ijk,ik->ijk', -cell_tensor, d_n).sum(0)  (literal
        # torch semantics, requires K == B). The negation is folded into the
        # (B, H) result instead of materializing -cell_tensor (K, B, H).
        mem = -jnp.sum(cell_t * d_n[:, None, :], axis=0)            # (B, H)
        y = jnp.dot(mem.astype(mm_dtype), w_first_ref[n].astype(mm_dtype),
                    preferred_element_type=jnp.float32)             # (B, H)
        # LayerNorm over H with eps == hidden_size (faithful to the torch ctor).
        mu = jnp.mean(y, axis=-1, keepdims=True)
        var = jnp.mean((y - mu) ** 2, axis=-1, keepdims=True)
        z = (y - mu) * jax.lax.rsqrt(var + ln_eps)
        first_sum = first_sum + z * ln_g + ln_b

    cell_new = first_sum + second                     # (B, H)
    hidden_new = jnp.tanh(cell_new) * o_gate          # (B, H)
    output = jnp.dot(hidden_new.astype(mm_dtype), w_out_ref[...].astype(mm_dtype),
                     preferred_element_type=jnp.float32) + b_out_ref[...]

    out_ref[...] = output
    hid_ref[...] = hidden_new
    # h_c_1 = cat([cell_tensor, cell[None]], 0)[1:]  (shift + append). The HBM
    # buffer of cell_tensor is aliased to hc1 via input_output_aliases.
    hc1_ref[0:K - 1, :, :] = cell_t[1:K, :, :]
    hc1_ref[K - 1, :, :] = cell_new


def fmlstm_cell(sample, hidden, cell_tensor, d_0, fused, *,
                hidden_size, k, n_banks, matmul_dtype=jnp.float32):
    """Pallas-backed FMLSTMCell.forward.

    Returns (output, hidden, h_c_1, d_values) with d_values stacked as a
    (n_banks, B, H) array instead of a Python list.
    """
    B = sample.shape[0]
    H = hidden_size
    out_size = fused["w_out"].shape[1]

    if hidden is None:
        hidden = jnp.zeros((B, H), dtype=sample.dtype)
    if cell_tensor is None:
        cell_tensor = jnp.zeros((k, B, H), dtype=sample.dtype)
    if d_0 is None:
        d_0 = jnp.zeros((n_banks, B, H), dtype=sample.dtype)

    if cell_tensor.shape[0] != B:
        raise ValueError(
            "FMLSTMCell.forward's einsum('ijk,ik->ijk', ...) requires "
            f"k == batch_size; got k={cell_tensor.shape[0]}, batch={B}.")

    # Glue: concatenation of input, hidden and all d0 banks stays in plain JAX.
    combined = jnp.concatenate([sample, hidden] + [d_0[n] for n in range(n_banks)],
                               axis=1)                       # (B, I+H+NB*H)

    inputs = (combined, cell_tensor,
              fused["w_big"], fused["b_big"], fused["w_first"],
              fused["ln_gamma"], fused["ln_beta"], fused["w_out"], fused["b_out"])

    out_shapes = (
        jax.ShapeDtypeStruct((B, out_size), jnp.float32),    # output
        jax.ShapeDtypeStruct((B, H), jnp.float32),           # new hidden
        jax.ShapeDtypeStruct((k, B, H), jnp.float32),        # h_c_1
        jax.ShapeDtypeStruct((n_banks, B, H), jnp.float32),  # d_values (stacked)
    )

    def vmem():
        return pl.BlockSpec(memory_space=pltpu.MemorySpace.VMEM)

    kernel = functools.partial(_fmlstm_kernel,
                               ln_eps=float(hidden_size),
                               mm_dtype=matmul_dtype)

    fn = pl.pallas_call(
        kernel,
        out_shape=out_shapes,
        in_specs=[vmem() for _ in inputs],
        out_specs=tuple(vmem() for _ in out_shapes),
        # cell_tensor (input 1) aliases h_c_1 (output 2): no fresh (K,B,H) HBM
        # allocation; the shifted stack is written in place.
        input_output_aliases={1: 2},
    )
    return fn(*inputs)


def _init_params(key, input_size, hidden_size, n_banks, output_size):
    """Deterministic nn.Linear-style init; weights stored as (in, out)."""
    def linear(key, fan_in, fan_out, with_bias=True):
        kw, kb = jax.random.split(key)
        bound = 1.0 / np.sqrt(fan_in)
        w = jax.random.uniform(kw, (fan_in, fan_out), jnp.float32, -bound, bound)
        if not with_bias:
            return w, None
        b = jax.random.uniform(kb, (1, fan_out), jnp.float32, -bound, bound)
        return w, b

    keys = jax.random.split(key, 4 + 2 * n_banks)
    wc, bc = linear(keys[0], input_size + hidden_size, hidden_size)
    wi, bi = linear(keys[1], input_size + hidden_size, hidden_size)
    wo, bo = linear(keys[2], input_size + hidden_size, hidden_size)
    w_out, b_out = linear(keys[3], hidden_size, output_size)

    w_f, b_f, w_first = [], [], []
    for n in range(n_banks):
        wf, bf = linear(keys[4 + n], input_size + 2 * hidden_size, hidden_size)
        w_f.append(wf)
        b_f.append(bf)
        wfirst, _ = linear(keys[4 + n_banks + n], hidden_size, hidden_size,
                           with_bias=False)
        w_first.append(wfirst)

    return dict(wc=wc, bc=bc, wi=wi, bi=bi, wo=wo, bo=bo,
                w_f=jnp.stack(w_f), b_f=jnp.stack(b_f),
                w_first=jnp.stack(w_first),
                ln_gamma=jnp.ones((1, hidden_size), jnp.float32),
                ln_beta=jnp.zeros((1, hidden_size), jnp.float32),
                w_out=w_out, b_out=b_out)


def pack_params(params, input_size, hidden_size):
    """One-time fusion of all gate weights into the kernel's lane-dense layout.

    The big matmul input is [sample | hidden | d0_0 | ... | d0_{NB-1}], so:
      - c/i/o columns get zero rows for every d0 block,
      - bank n's f-gate columns get its d0 weight rows only in block n.
    """
    ih = input_size + hidden_size
    H = hidden_size
    nb = params["w_f"].shape[0]
    zero_d_all = jnp.zeros((nb * H, H), jnp.float32)
    cols = [jnp.concatenate([params["wc"], zero_d_all], axis=0),
            jnp.concatenate([params["wi"], zero_d_all], axis=0),
            jnp.concatenate([params["wo"], zero_d_all], axis=0)]
    for n in range(nb):
        wf = params["w_f"][n]                                  # (I+2H, H)
        blocks = [wf[:ih]]
        for m in range(nb):
            blocks.append(wf[ih:] if m == n else jnp.zeros((H, H), jnp.float32))
        cols.append(jnp.concatenate(blocks, axis=0))
    w_big = jnp.concatenate(cols, axis=1)                      # (I+H+NB*H, (3+NB)H)
    b_big = jnp.concatenate(
        [params["bc"], params["bi"], params["bo"]]
        + [params["b_f"][n] for n in range(nb)], axis=1)       # (1, (3+NB)H)
    return dict(w_big=w_big, b_big=b_big,
                w_first=params["w_first"],
                ln_gamma=params["ln_gamma"], ln_beta=params["ln_beta"],
                w_out=params["w_out"], b_out=params["b_out"])


def _reference(sample, hidden, cell_tensor, d_0, params, ln_eps):
    """Pure-JAX replica of the torch FMLSTMCell.forward, for correctness."""
    nb = d_0.shape[0]
    combined = jnp.concatenate([sample, hidden], axis=1)
    d_values = []
    for n in range(nb):
        combined_d = jnp.concatenate([sample, hidden, d_0[n]], axis=1)
        d = jax.nn.sigmoid(combined_d @ params["w_f"][n] + params["b_f"][n]) * 0.5
        d_values.append(d)
    i_gate = jax.nn.sigmoid(combined @ params["wi"] + params["bi"])
    o_gate = jax.nn.sigmoid(combined @ params["wo"] + params["bo"])
    c_tilde = jnp.tanh(combined @ params["wc"] + params["bc"])
    second = c_tilde * i_gate
    first_sum = jnp.zeros_like(second)
    for n in range(nb):
        first = jnp.einsum("ijk,ik->ijk", -cell_tensor, d_values[n]).sum(axis=0)
        first = first @ params["w_first"][n]
        mu = jnp.mean(first, axis=-1, keepdims=True)
        var = jnp.mean((first - mu) ** 2, axis=-1, keepdims=True)
        ln = ((first - mu) / jnp.sqrt(var + ln_eps)) * params["ln_gamma"] \
             + params["ln_beta"]
        first_sum = first_sum + ln
    cell = first_sum + second
    h_c_1 = jnp.concatenate([cell_tensor, cell[None]], axis=0)[1:]
    hidden_new = jnp.tanh(cell) * o_gate
    output = hidden_new @ params["w_out"] + params["b_out"]
    return output, hidden_new, h_c_1, jnp.stack(d_values, axis=0)


if __name__ == "__main__":
    batch = 8        # >= 8 so sublanes / MXU LHS rows are not mostly padding
    k = 8            # torch forward's einsum requires k == batch_size
    input_size = 16
    hidden_size = 32
    n_banks = 2
    output_size = 8

    key = jax.random.PRNGKey(0)
    k_par, k_x, k_h, k_c, k_d = jax.random.split(key, 5)

    params = _init_params(k_par, input_size, hidden_size, n_banks, output_size)
    fused = pack_params(params, input_size, hidden_size)

    sample = jax.random.normal(k_x, (batch, input_size), jnp.float32)
    hidden = jax.random.normal(k_h, (batch, hidden_size), jnp.float32)
    cell_tensor = jax.random.normal(k_c, (k, batch, hidden_size), jnp.float32)
    d_0 = jax.random.normal(k_d, (n_banks, batch, hidden_size), jnp.float32)

    ref_out, ref_hid, ref_hc1, ref_d = _reference(
        sample, hidden, cell_tensor, d_0, params, float(hidden_size))

    out, hid, hc1, dvals = fmlstm_cell(
        sample, hidden, cell_tensor, d_0, fused,
        hidden_size=hidden_size, k=k, n_banks=n_banks,
        matmul_dtype=jnp.float32)  # set jnp.bfloat16 on v6e/v7x for MXU rate
    jax.block_until_ready((out, hid, hc1, dvals))

    np.testing.assert_allclose(np.asarray(out), np.asarray(ref_out),
                               rtol=2e-4, atol=2e-4)
    np.testing.assert_allclose(np.asarray(hid), np.asarray(ref_hid),
                               rtol=2e-4, atol=2e-4)
    np.testing.assert_allclose(np.asarray(hc1), np.asarray(ref_hc1),
                               rtol=2e-4, atol=2e-4)
    np.testing.assert_allclose(np.asarray(dvals), np.asarray(ref_d),
                               rtol=2e-4, atol=2e-4)

    print("KERNEL_OK")
</pallas_src>

<mosaic_0001>
module attributes {stable_mosaic.version = 11 : i64} {
  func.func @_fmlstm_kernel(%arg0: memref<8x112xf32, #tpu.memory_space<vmem>>, %arg1: memref<8x8x32xf32, #tpu.memory_space<vmem>>, %arg2: memref<112x160xf32, #tpu.memory_space<vmem>>, %arg3: memref<1x160xf32, #tpu.memory_space<vmem>>, %arg4: memref<2x32x32xf32, #tpu.memory_space<vmem>>, %arg5: memref<1x32xf32, #tpu.memory_space<vmem>>, %arg6: memref<1x32xf32, #tpu.memory_space<vmem>>, %arg7: memref<32x8xf32, #tpu.memory_space<vmem>>, %arg8: memref<1x8xf32, #tpu.memory_space<vmem>>, %arg9: memref<8x8xf32, #tpu.memory_space<vmem>>, %arg10: memref<8x32xf32, #tpu.memory_space<vmem>>, %arg11: memref<8x8x32xf32, #tpu.memory_space<vmem>>, %arg12: memref<2x8x32xf32, #tpu.memory_space<vmem>>) attributes {dimension_semantics = [], scalar_prefetch = 0 : i64, scratch_operands = 0 : i64, tpu.core_type = #tpu.core_type<tc>} {
    %c0 = arith.constant 0 : index
    %c0_0 = arith.constant 0 : index
    %0 = vector.load %arg0[%c0, %c0_0] : memref<8x112xf32, #tpu.memory_space<vmem>>, vector<8x112xf32>
    %c0_1 = arith.constant 0 : index
    %c0_2 = arith.constant 0 : index
    %c0_3 = arith.constant 0 : index
    %1 = vector.load %arg1[%c0_1, %c0_2, %c0_3] : memref<8x8x32xf32, #tpu.memory_space<vmem>>, vector<8x8x32xf32>
    %c0_4 = arith.constant 0 : index
    %c0_5 = arith.constant 0 : index
    %2 = vector.load %arg2[%c0_4, %c0_5] : memref<112x160xf32, #tpu.memory_space<vmem>>, vector<112x160xf32>
    %cst = arith.constant dense<0.000000e+00> : vector<8x160xf32>
    %3 = tpu.matmul %0, %2, %cst {dimension_numbers = #tpu.dot_dimension_numbers<[1], [0], [0], [1], [0, 0, 1, 1], [], []>} : vector<8x112xf32>, vector<112x160xf32>, vector<8x160xf32> -> vector<8x160xf32>
    %c0_6 = arith.constant 0 : index
    %c0_7 = arith.constant 0 : index
    %4 = vector.load %arg3[%c0_6, %c0_7] : memref<1x160xf32, #tpu.memory_space<vmem>>, vector<1x160xf32>
    %5 = vector.broadcast %4 : vector<1x160xf32> to vector<8x160xf32>
    %6 = arith.addf %3, %5 : vector<8x160xf32>
    %7 = vector.extract_strided_slice %6 {offsets = [0, 0], sizes = [8, 32], strides = [1, 1]} : vector<8x160xf32> to vector<8x32xf32>
    %8 = math.tanh %7 : vector<8x32xf32>
    %9 = vector.extract_strided_slice %6 {offsets = [0, 32], sizes = [8, 32], strides = [1, 1]} : vector<8x160xf32> to vector<8x32xf32>
    %10 = arith.negf %9 : vector<8x32xf32>
    %11 = math.exp %10 : vector<8x32xf32>
    %cst_8 = arith.constant 1.000000e+00 : f32
    %12 = vector.broadcast %cst_8 : f32 to vector<8x32xf32>
    %13 = arith.addf %12, %11 : vector<8x32xf32>
    %14 = arith.divf %12, %13 : vector<8x32xf32>
    %15 = vector.extract_strided_slice %6 {offsets = [0, 64], sizes = [8, 32], strides = [1, 1]} : vector<8x160xf32> to vector<8x32xf32>
    %16 = arith.negf %15 : vector<8x32xf32>
    %17 = math.exp %16 : vector<8x32xf32>
    %cst_9 = arith.constant 1.000000e+00 : f32
    %18 = vector.broadcast %cst_9 : f32 to vector<8x32xf32>
    %19 = arith.addf %18, %17 : vector<8x32xf32>
    %20 = arith.divf %18, %19 : vector<8x32xf32>
    %21 = arith.mulf %8, %14 : vector<8x32xf32>
    %c0_10 = arith.constant 0 : index
    %c0_11 = arith.constant 0 : index
    %22 = vector.load %arg5[%c0_10, %c0_11] : memref<1x32xf32, #tpu.memory_space<vmem>>, vector<1x32xf32>
    %c0_12 = arith.constant 0 : index
    %c0_13 = arith.constant 0 : index
    %23 = vector.load %arg6[%c0_12, %c0_13] : memref<1x32xf32, #tpu.memory_space<vmem>>, vector<1x32xf32>
    %cst_14 = arith.constant 0.000000e+00 : f32
    %24 = vector.broadcast %cst_14 : f32 to vector<8x32xf32>
    %25 = vector.extract_strided_slice %6 {offsets = [0, 96], sizes = [8, 32], strides = [1, 1]} : vector<8x160xf32> to vector<8x32xf32>
    %26 = arith.negf %25 : vector<8x32xf32>
    %27 = math.exp %26 : vector<8x32xf32>
    %cst_15 = arith.constant 1.000000e+00 : f32
    %28 = vector.broadcast %cst_15 : f32 to vector<8x32xf32>
    %29 = arith.addf %28, %27 : vector<8x32xf32>
    %30 = arith.divf %28, %29 : vector<8x32xf32>
    %cst_16 = arith.constant 5.000000e-01 : f32
    %31 = vector.broadcast %cst_16 : f32 to vector<8x32xf32>
    %32 = arith.mulf %30, %31 : vector<8x32xf32>
    %c0_17 = arith.constant 0 : index
    %c0_18 = arith.constant 0 : index
    %c0_19 = arith.constant 0 : index
    %33 = vector.load %arg12[%c0_17, %c0_18, %c0_19] : memref<2x8x32xf32, #tpu.memory_space<vmem>>, vector<1x8x32xf32>
    %34 = vector.shape_cast %33 : vector<1x8x32xf32> to vector<8x32xf32>
    %35 = vector.shape_cast %32 : vector<8x32xf32> to vector<1x8x32xf32>
    tpu.vector_store %arg12[%c0_17, %c0_18, %c0_19], %35 {strides = array<i32>} : memref<2x8x32xf32, #tpu.memory_space<vmem>>, vector<1x8x32xf32>,
    %36 = vector.shape_cast %32 : vector<8x32xf32> to vector<8x1x32xf32>
    %37 = vector.broadcast %36 : vector<8x1x32xf32> to vector<8x8x32xf32>
    %38 = arith.mulf %1, %37 : vector<8x8x32xf32>
    %cst_20 = arith.constant dense<0.000000e+00> : vector<8x32xf32>
    %39 = vector.multi_reduction <add>, %38, %cst_20 [0] : vector<8x8x32xf32> to vector<8x32xf32>
    %cst_21 = arith.constant 0.000000e+00 : f32
    %40 = vector.broadcast %cst_21 : f32 to vector<8x32xf32>
    %41 = arith.subf %40, %39 : vector<8x32xf32>
    %c0_22 = arith.constant 0 : index
    %c0_23 = arith.constant 0 : index
    %c0_24 = arith.constant 0 : index
    %42 = vector.load %arg4[%c0_22, %c0_23, %c0_24] : memref<2x32x32xf32, #tpu.memory_space<vmem>>, vector<1x32x32xf32>
    %43 = vector.shape_cast %42 : vector<1x32x32xf32> to vector<32x32xf32>
    %cst_25 = arith.constant dense<0.000000e+00> : vector<8x32xf32>
    %44 = tpu.matmul %41, %43, %cst_25 {dimension_numbers = #tpu.dot_dimension_numbers<[1], [0], [0], [1], [0, 0, 1, 1], [], []>} : vector<8x32xf32>, vector<32x32xf32>, vector<8x32xf32> -> vector<8x32xf32>
    %cst_26 = arith.constant dense<0.000000e+00> : vector<8xf32>
    %45 = vector.multi_reduction <add>, %44, %cst_26 [1] : vector<8x32xf32> to vector<8xf32>
    %46 = vector.shape_cast %45 : vector<8xf32> to vector<8x1xf32>
    %cst_27 = arith.constant 3.200000e+01 : f32
    %47 = vector.broadcast %cst_27 : f32 to vector<8x1xf32>
    %48 = arith.divf %46, %47 : vector<8x1xf32>
    %49 = vector.broadcast %48 : vector<8x1xf32> to vector<8x32xf32>
    %50 = arith.subf %44, %49 : vector<8x32xf32>
    %51 = arith.mulf %50, %50 : vector<8x32xf32>
    %cst_28 = arith.constant dense<0.000000e+00> : vector<8xf32>
    %52 = vector.multi_reduction <add>, %51, %cst_28 [1] : vector<8x32xf32> to vector<8xf32>
    %53 = vector.shape_cast %52 : vector<8xf32> to vector<8x1xf32>
    %cst_29 = arith.constant 3.200000e+01 : f32
    %54 = vector.broadcast %cst_29 : f32 to vector<8x1xf32>
    %55 = arith.divf %53, %54 : vector<8x1xf32>
    %56 = vector.broadcast %48 : vector<8x1xf32> to vector<8x32xf32>
    %57 = arith.subf %44, %56 : vector<8x32xf32>
    %cst_30 = arith.constant 3.200000e+01 : f32
    %58 = vector.broadcast %cst_30 : f32 to vector<8x1xf32>
    %59 = arith.addf %55, %58 : vector<8x1xf32>
    %60 = math.rsqrt %59 : vector<8x1xf32>
    %61 = vector.broadcast %60 : vector<8x1xf32> to vector<8x32xf32>
    %62 = arith.mulf %57, %61 : vector<8x32xf32>
    %63 = vector.broadcast %22 : vector<1x32xf32> to vector<8x32xf32>
    %64 = arith.mulf %62, %63 : vector<8x32xf32>
    %65 = arith.addf %24, %64 : vector<8x32xf32>
    %66 = vector.broadcast %23 : vector<1x32xf32> to vector<8x32xf32>
    %67 = arith.addf %65, %66 : vector<8x32xf32>
    %68 = vector.extract_strided_slice %6 {offsets = [0, 128], sizes = [8, 32], strides = [1, 1]} : vector<8x160xf32> to vector<8x32xf32>
    %69 = arith.negf %68 : vector<8x32xf32>
    %70 = math.exp %69 : vector<8x32xf32>
    %cst_31 = arith.constant 1.000000e+00 : f32
    %71 = vector.broadcast %cst_31 : f32 to vector<8x32xf32>
    %72 = arith.addf %71, %70 : vector<8x32xf32>
    %73 = arith.divf %71, %72 : vector<8x32xf32>
    %cst_32 = arith.constant 5.000000e-01 : f32
    %74 = vector.broadcast %cst_32 : f32 to vector<8x32xf32>
    %75 = arith.mulf %73, %74 : vector<8x32xf32>
    %c1 = arith.constant 1 : index
    %c0_33 = arith.constant 0 : index
    %c0_34 = arith.constant 0 : index
    %76 = vector.load %arg12[%c1, %c0_33, %c0_34] : memref<2x8x32xf32, #tpu.memory_space<vmem>>, vector<1x8x32xf32>
    %77 = vector.shape_cast %76 : vector<1x8x32xf32> to vector<8x32xf32>
    %78 = vector.shape_cast %75 : vector<8x32xf32> to vector<1x8x32xf32>
    tpu.vector_store %arg12[%c1, %c0_33, %c0_34], %78 {strides = array<i32>} : memref<2x8x32xf32, #tpu.memory_space<vmem>>, vector<1x8x32xf32>,
    %79 = vector.shape_cast %75 : vector<8x32xf32> to vector<8x1x32xf32>
    %80 = vector.broadcast %79 : vector<8x1x32xf32> to vector<8x8x32xf32>
    %81 = arith.mulf %1, %80 : vector<8x8x32xf32>
    %cst_35 = arith.constant dense<0.000000e+00> : vector<8x32xf32>
    %82 = vector.multi_reduction <add>, %81, %cst_35 [0] : vector<8x8x32xf32> to vector<8x32xf32>
    %cst_36 = arith.constant 0.000000e+00 : f32
    %83 = vector.broadcast %cst_36 : f32 to vector<8x32xf32>
    %84 = arith.subf %83, %82 : vector<8x32xf32>
    %c1_37 = arith.constant 1 : index
    %c0_38 = arith.constant 0 : index
    %c0_39 = arith.constant 0 : index
    %85 = vector.load %arg4[%c1_37, %c0_38, %c0_39] : memref<2x32x32xf32, #tpu.memory_space<vmem>>, vector<1x32x32xf32>
    %86 = vector.shape_cast %85 : vector<1x32x32xf32> to vector<32x32xf32>
    %cst_40 = arith.constant dense<0.000000e+00> : vector<8x32xf32>
    %87 = tpu.matmul %84, %86, %cst_40 {dimension_numbers = #tpu.dot_dimension_numbers<[1], [0], [0], [1], [0, 0, 1, 1], [], []>} : vector<8x32xf32>, vector<32x32xf32>, vector<8x32xf32> -> vector<8x32xf32>
    %cst_41 = arith.constant dense<0.000000e+00> : vector<8xf32>
    %88 = vector.multi_reduction <add>, %87, %cst_41 [1] : vector<8x32xf32> to vector<8xf32>
    %89 = vector.shape_cast %88 : vector<8xf32> to vector<8x1xf32>
    %cst_42 = arith.constant 3.200000e+01 : f32
    %90 = vector.broadcast %cst_42 : f32 to vector<8x1xf32>
    %91 = arith.divf %89, %90 : vector<8x1xf32>
    %92 = vector.broadcast %91 : vector<8x1xf32> to vector<8x32xf32>
    %93 = arith.subf %87, %92 : vector<8x32xf32>
    %94 = arith.mulf %93, %93 : vector<8x32xf32>
    %cst_43 = arith.constant dense<0.000000e+00> : vector<8xf32>
    %95 = vector.multi_reduction <add>, %94, %cst_43 [1] : vector<8x32xf32> to vector<8xf32>
    %96 = vector.shape_cast %95 : vector<8xf32> to vector<8x1xf32>
    %cst_44 = arith.constant 3.200000e+01 : f32
    %97 = vector.broadcast %cst_44 : f32 to vector<8x1xf32>
    %98 = arith.divf %96, %97 : vector<8x1xf32>
    %99 = vector.broadcast %91 : vector<8x1xf32> to vector<8x32xf32>
    %100 = arith.subf %87, %99 : vector<8x32xf32>
    %cst_45 = arith.constant 3.200000e+01 : f32
    %101 = vector.broadcast %cst_45 : f32 to vector<8x1xf32>
    %102 = arith.addf %98, %101 : vector<8x1xf32>
    %103 = math.rsqrt %102 : vector<8x1xf32>
    %104 = vector.broadcast %103 : vector<8x1xf32> to vector<8x32xf32>
    %105 = arith.mulf %100, %104 : vector<8x32xf32>
    %106 = vector.broadcast %22 : vector<1x32xf32> to vector<8x32xf32>
    %107 = arith.mulf %105, %106 : vector<8x32xf32>
    %108 = arith.addf %67, %107 : vector<8x32xf32>
    %109 = vector.broadcast %23 : vector<1x32xf32> to vector<8x32xf32>
    %110 = arith.addf %108, %109 : vector<8x32xf32>
    %111 = arith.addf %110, %21 : vector<8x32xf32>
    %112 = math.tanh %111 : vector<8x32xf32>
    %113 = arith.mulf %112, %20 : vector<8x32xf32>
    %c0_46 = arith.constant 0 : index
    %c0_47 = arith.constant 0 : index
    %114 = vector.load %arg7[%c0_46, %c0_47] : memref<32x8xf32, #tpu.memory_space<vmem>>, vector<32x8xf32>
    %cst_48 = arith.constant dense<0.000000e+00> : vector<8x8xf32>
    %115 = tpu.matmul %113, %114, %cst_48 {dimension_numbers = #tpu.dot_dimension_numbers<[1], [0], [0], [1], [0, 0, 1, 1], [], []>} : vector<8x32xf32>, vector<32x8xf32>, vector<8x8xf32> -> vector<8x8xf32>
    %c0_49 = arith.constant 0 : index
    %c0_50 = arith.constant 0 : index
    %116 = vector.load %arg8[%c0_49, %c0_50] : memref<1x8xf32, #tpu.memory_space<vmem>>, vector<1x8xf32>
    %117 = vector.broadcast %116 : vector<1x8xf32> to vector<8x8xf32>
    %118 = arith.addf %115, %117 : vector<8x8xf32>
    %c0_51 = arith.constant 0 : index
    %c0_52 = arith.constant 0 : index
    %119 = vector.load %arg9[%c0_51, %c0_52] : memref<8x8xf32, #tpu.memory_space<vmem>>, vector<8x8xf32>
    tpu.vector_store %arg9[%c0_51, %c0_52], %118 {strides = array<i32>} : memref<8x8xf32, #tpu.memory_space<vmem>>, vector<8x8xf32>,
    %c0_53 = arith.constant 0 : index
    %c0_54 = arith.constant 0 : index
    %120 = vector.load %arg10[%c0_53, %c0_54] : memref<8x32xf32, #tpu.memory_space<vmem>>, vector<8x32xf32>
    tpu.vector_store %arg10[%c0_53, %c0_54], %113 {strides = array<i32>} : memref<8x32xf32, #tpu.memory_space<vmem>>, vector<8x32xf32>,
    %121 = vector.extract_strided_slice %1 {offsets = [1, 0, 0], sizes = [7, 8, 32], strides = [1, 1, 1]} : vector<8x8x32xf32> to vector<7x8x32xf32>
    %c0_55 = arith.constant 0 : index
    %c0_56 = arith.constant 0 : index
    %c0_57 = arith.constant 0 : index
    %122 = vector.load %arg11[%c0_55, %c0_56, %c0_57] : memref<8x8x32xf32, #tpu.memory_space<vmem>>, vector<7x8x32xf32>
    tpu.vector_store %arg11[%c0_55, %c0_56, %c0_57], %121 {strides = array<i32>} : memref<8x8x32xf32, #tpu.memory_space<vmem>>, vector<7x8x32xf32>,
    %c7 = arith.constant 7 : index
    %c0_58 = arith.constant 0 : index
    %c0_59 = arith.constant 0 : index
    %123 = vector.load %arg11[%c7, %c0_58, %c0_59] : memref<8x8x32xf32, #tpu.memory_space<vmem>>, vector<1x8x32xf32>
    %124 = vector.shape_cast %123 : vector<1x8x32xf32> to vector<8x32xf32>
    %125 = vector.shape_cast %111 : vector<8x32xf32> to vector<1x8x32xf32>
    tpu.vector_store %arg11[%c7, %c0_58, %c0_59], %125 {strides = array<i32>} : memref<8x8x32xf32, #tpu.memory_space<vmem>>, vector<1x8x32xf32>,
    return
  }
}

</mosaic_0001>

<llo_original>
// kernel: tpu_custom_call.1
$region0: #{tpu_custom_call.1}
  #allocation0 [shape = 'u32[]', space=smem, size = 0x4, offset = 0x4, fixed_abs, tag = 'smem constant byte address 0x4 - core index']
  #allocation1 [shape = 'u32[72,128]{1,0:T(1,128)}', space=vmem, size = 0x9000, scoped, tag = 'internal scratch']
  %s0 = inlined_call_operand.vmem [shape: f32[8,112], index: 0, kind: input, shape index: {}]
  %s1 = inlined_call_operand.hbm [shape: f32[8,8,32], index: 1, kind: input, shape index: {}, may-alias: {1,11}]
  %s2 = inlined_call_operand.vmem [shape: f32[112,160], index: 2, kind: input, shape index: {}]
  %s3 = inlined_call_operand.vmem [shape: f32[1,160], index: 3, kind: input, shape index: {}]
  %s4 = inlined_call_operand.vmem [shape: f32[2,32,32], index: 4, kind: input, shape index: {}]
  %s5 = inlined_call_operand.vmem [shape: f32[1,32], index: 5, kind: input, shape index: {}]
  %s6 = inlined_call_operand.vmem [shape: f32[1,32], index: 6, kind: input, shape index: {}]
  %s7 = inlined_call_operand.vmem [shape: f32[32,8], index: 7, kind: input, shape index: {}]
  %s8 = inlined_call_operand.vmem [shape: f32[1,8], index: 8, kind: input, shape index: {}]
  %s9 = inlined_call_operand.hbm [shape: f32[8,8], index: 9, kind: output, shape index: {0}]
  %s10 = inlined_call_operand.hbm [shape: f32[8,32], index: 10, kind: output, shape index: {1}]
  %s11 = inlined_call_operand.hbm [shape: f32[8,8,32], index: 11, kind: output, shape index: {2}, may-alias: {1,11}]
  %s12 = inlined_call_operand.hbm [shape: f32[2,8,32], index: 12, kind: output, shape index: {3}]
  %13 = xla_tuple %s9, %s10, %s11, %s12
  %s14 = sld [smem:[#allocation0]]
  $region74: #{tpu_custom_call.1} parent=0
    _
  %s16 = ssub.s32 1, %s14
  %s17 = scalar_select 0, %s16, %s14
  $region1: #{tpu_custom_call.1} parent=0
    #allocation2 [shape = 'u8[32768]{0}', space=vmem, size = 0x8000, scoped, tag = 'input window, operand 1, single buffered']
    #allocation3 [shape = 's32[1]{0}', space=sflag, size = 0x4, scoped, tag = 'scoped memory for tpu_custom_call.1']
    #allocation4 [shape = 's32[1]{0}', space=sflag, size = 0x4, scoped, tag = 'scoped memory for tpu_custom_call.1']
    #allocation5 [shape = 'u8[4096]{0}', space=vmem, size = 0x1000, scoped, tag = 'output window, operand 0, single buffered']
    #allocation6 [shape = 'u8[4096]{0}', space=vmem, size = 0x1000, scoped, tag = 'output window, operand 1, single buffered']
    #allocation7 [shape = 's32[1]{0}', space=sflag, size = 0x4, scoped, tag = 'scoped memory for tpu_custom_call.1']
    #allocation8 [shape = 'u8[32768]{0}', space=vmem, size = 0x8000, scoped, tag = 'output window, operand 2, single buffered']
    #allocation9 [shape = 'u8[8192]{0}', space=vmem, size = 0x2000, scoped, tag = 'output window, operand 3, single buffered']
    #allocation10 [shape = 's32[1]{0}', space=sflag, size = 0x4, scoped, tag = 'scoped memory for tpu_custom_call.1']
    %18 = vsyncpa [#allocation3], 0
    %19 = vsyncpa [#allocation4], 0
    %20 = vsyncpa [#allocation7], 0
    %21 = vsyncpa [#allocation10], 0
    // Predicated region
    $region2: #{tpu_custom_call.1} parent=1 // pred_check
      _
    $region3: #{tpu_custom_call.1} parent=1 // pred_check_branch
      %23 = sbr.rel (0) target = $region5
    $region4: #{tpu_custom_call.1} parent=1 // pred_region
      _
    $region5: #{tpu_custom_call.1} parent=1 // pred_fallthru
      _
    // Predicated region
    $region6: #{tpu_custom_call.1} parent=1 // pred_check
      _
    $region7: #{tpu_custom_call.1} parent=1 // pred_check_branch
      %25 = sbr.rel (0) target = $region9
    $region8: #{tpu_custom_call.1} parent=1 // pred_region
      %27 = vsyncadd [#allocation3], 0
      %s28 = sshll.u32 %s1, 4
      %s29 = int_to_ptr.hbm [resolvable:$true] %s28
      %s30 = sshll.u32 [#allocation2], 4
      %s31 = int_to_ptr.vmem [resolvable:$true] %s30
      %36 = dma.hbm_to_vmem [thread:$0]  %s29, 1024, %s31, [#allocation3], 128, 128, 8
    $region9: #{tpu_custom_call.1} parent=1 // pred_fallthru
      _
    // Predicated region
    $region10: #{tpu_custom_call.1} parent=1 // pred_check
      _
    $region11: #{tpu_custom_call.1} parent=1 // pred_check_branch
      %38 = sbr.rel (0) target = $region13
    $region12: #{tpu_custom_call.1} parent=1 // pred_region
      _
    $region13: #{tpu_custom_call.1} parent=1 // pred_fallthru
      _
    // Predicated region
    $region14: #{tpu_custom_call.1} parent=1 // pred_check
      _
    $region15: #{tpu_custom_call.1} parent=1 // pred_check_branch
      %40 = sbr.rel (0) target = $region17
    $region16: #{tpu_custom_call.1} parent=1 // pred_region
      _
    $region17: #{tpu_custom_call.1} parent=1 // pred_fallthru
      _
    // Predicated region
    $region18: #{tpu_custom_call.1} parent=1 // pred_check
      _
    $region19: #{tpu_custom_call.1} parent=1 // pred_check_branch
      %42 = sbr.rel (0) target = $region21
    $region20: #{tpu_custom_call.1} parent=1 // pred_region
      _
    $region21: #{tpu_custom_call.1} parent=1 // pred_fallthru
      _
    // Predicated region
    $region22: #{tpu_custom_call.1} parent=1 // pred_check
      _
    $region23: #{tpu_custom_call.1} parent=1 // pred_check_branch
      %44 = sbr.rel (0) target = $region25
    $region24: #{tpu_custom_call.1} parent=1 // pred_region
      _
    $region25: #{tpu_custom_call.1} parent=1 // pred_fallthru
      _
    // Predicated region
    $region26: #{tpu_custom_call.1} parent=1 // pred_check
      _
    $region27: #{tpu_custom_call.1} parent=1 // pred_check_branch
      %46 = sbr.rel (0) target = $region29
    $region28: #{tpu_custom_call.1} parent=1 // pred_region
      _
    $region29: #{tpu_custom_call.1} parent=1 // pred_fallthru
      _
    // Predicated region
    $region30: #{tpu_custom_call.1} parent=1 // pred_check
      _
    $region31: #{tpu_custom_call.1} parent=1 // pred_check_branch
      %48 = sbr.rel (0) target = $region33
    $region32: #{tpu_custom_call.1} parent=1 // pred_region
      _
    $region33: #{tpu_custom_call.1} parent=1 // pred_fallthru
      _
    // Predicated region
    $region34: #{tpu_custom_call.1} parent=1 // pred_check
      _
    $region35: #{tpu_custom_call.1} parent=1 // pred_check_branch
      %50 = sbr.rel (0) target = $region37
    $region36: #{tpu_custom_call.1} parent=1 // pred_region
      _
    $region37: #{tpu_custom_call.1} parent=1 // pred_fallthru
      _
    // Predicated region
    $region38: #{tpu_custom_call.1} parent=1 // pred_check
      _
    $region39: #{tpu_custom_call.1} parent=1 // pred_check_branch
      %52 = sbr.rel (0) target = $region41
    $region40: #{tpu_custom_call.1} parent=1 // pred_region
      %54 = dma.done [#allocation3], 1024
    $region41: #{tpu_custom_call.1} parent=1 // pred_fallthru
      _
    %v55 = vld [vmem:[%s0] sm:$0xff]
    %v56 = vld [vmem:[#allocation2] sm:$0xff]
    %v57 = vld [vmem:[#allocation2 + $0x8] sm:$0xff]
    %v58 = vld [vmem:[#allocation2 + $0x10] sm:$0xff]
    %v59 = vld [vmem:[#allocation2 + $0x18] sm:$0xff]
    %v60 = vld [vmem:[#allocation2 + $0x20] sm:$0xff]
    %v61 = vld [vmem:[#allocation2 + $0x28] sm:$0xff]
    %v62 = vld [vmem:[#allocation2 + $0x30] sm:$0xff]
    %v63 = vld [vmem:[#allocation2 + $0x38] sm:$0xff]
    %v64 = vld [vmem:[%s2] sm:$0xff]
    %v65 = vld [vmem:[%s2 + $0x8] sm:$0xff]
    %v66 = vld [vmem:[%s2 + $0x10] sm:$0xff]
    %v67 = vld [vmem:[%s2 + $0x18] sm:$0xff]
    %v68 = vld [vmem:[%s2 + $0x20] sm:$0xff]
    %v69 = vld [vmem:[%s2 + $0x28] sm:$0xff]
    %v70 = vld [vmem:[%s2 + $0x30] sm:$0xff]
    %v71 = vld [vmem:[%s2 + $0x38] sm:$0xff]
    %v72 = vld [vmem:[%s2 + $0x40] sm:$0xff]
    %v73 = vld [vmem:[%s2 + $0x48] sm:$0xff]
    %v74 = vld [vmem:[%s2 + $0x50] sm:$0xff]
    %v75 = vld [vmem:[%s2 + $0x58] sm:$0xff]
    %v76 = vld [vmem:[%s2 + $0x60] sm:$0xff]
    %v77 = vld [vmem:[%s2 + $0x68] sm:$0xff]
    %v78 = vld [vmem:[%s2 + $0x70] sm:$0xff]
    %v79 = vld [vmem:[%s2 + $0x78] sm:$0xff]
    %v80 = vld [vmem:[%s2 + $0x80] sm:$0xff]
    %v81 = vld [vmem:[%s2 + $0x88] sm:$0xff]
    %v82 = vld [vmem:[%s2 + $0x90] sm:$0xff]
    %v83 = vld [vmem:[%s2 + $0x98] sm:$0xff]
    %v84 = vld [vmem:[%s2 + $0xa0] sm:$0xff]
    %v85 = vld [vmem:[%s2 + $0xa8] sm:$0xff]
    %v86 = vld [vmem:[%s2 + $0xb0] sm:$0xff]
    %v87 = vld [vmem:[%s2 + $0xb8] sm:$0xff]
    %v88 = vld [vmem:[%s2 + $0xc0] sm:$0xff]
    %v89 = vld [vmem:[%s2 + $0xc8] sm:$0xff]
    %v90 = vld [vmem:[%s2 + $0xd0] sm:$0xff]
    %v91 = vld [vmem:[%s2 + $0xd8] sm:$0xff]
    %v92 = vld [vmem:[%s3] sm:$0x3]
    %v94 = vperm.slane %v92, 0
    %v95 = vperm.slane %v92, 1
    %vm98 = vcmask 916480
    %v100 = vsel %vm98, %v55, 0
    %102 = vmatpush.msra.mxu0 0.0
    %103 = vmatpush.msra.mxu0 0.0
    %104 = vmatpush.msra.mxu0 %v90
    %105 = vmatpush.msra.mxu0 %v88
    %106 = vmatpush.msra.mxu0 %v86
    %107 = vmatpush.msra.mxu0 %v84
    %108 = vmatpush.msra.mxu0 %v82
    %109 = vmatpush.msra.mxu0 %v80
    %110 = vmatpush.msra.mxu0 %v78
    %111 = vmatpush.msra.mxu0 %v76
    %112 = vmatpush.msra.mxu0 %v74
    %113 = vmatpush.msra.mxu0 %v72
    %114 = vmatpush.msra.mxu0 %v70
    %115 = vmatpush.msra.mxu0 %v68
    %116 = vmatpush.msra.mxu0 %v66
    %117 = vmatpush.msra.mxu0 %v64
    %118 = vmatmul.f32.gmra.mxu0 %v100
    %v119 = vpop.f32.mrf.mxu0
    %v120 = vadd.f32 %v94, %v119
    %121 = vdwg.mxu0
    %122 = vmatpush.msra.mxu0 0.0
    %123 = vmatpush.msra.mxu0 0.0
    %124 = vmatpush.msra.mxu0 %v91
    %125 = vmatpush.msra.mxu0 %v89
    %126 = vmatpush.msra.mxu0 %v87
    %127 = vmatpush.msra.mxu0 %v85
    %128 = vmatpush.msra.mxu0 %v83
    %129 = vmatpush.msra.mxu0 %v81
    %130 = vmatpush.msra.mxu0 %v79
    %131 = vmatpush.msra.mxu0 %v77
    %132 = vmatpush.msra.mxu0 %v75
    %133 = vmatpush.msra.mxu0 %v73
    %134 = vmatpush.msra.mxu0 %v71
    %135 = vmatpush.msra.mxu0 %v69
    %136 = vmatpush.msra.mxu0 %v67
    %137 = vmatpush.msra.mxu0 %v65
    %138 = vmatmul.f32.gmra.mxu0 %v100
    %v139 = vpop.f32.mrf.mxu0
    %v140 = vadd.f32 %v95, %v139
    %141 = vdwg.mxu0
    %v142 = vtanh.pop %v120
    %v143 = vxor.u32 %v120, 2147483648
    %v144 = vmul.f32 %v143, 1.442695
    %v145 = vpow.pop %v144
    %v146 = vadd.f32 %v145, 1.0
    %v147 = vrcp.pop %v146
    %v148 = vmul.f32 %v146, %v147
    %v149 = vsub.f32 1.0, %v148
    %v150 = vmul.f32 %v147, %v149
    %v151 = vadd.f32 %v147, %v150
    %vm152 = vweird.f32 %v146
    %vm153 = vweird.f32 %v147
    %vm154 = vmor %vm152, %vm153
    %v155 = vsel %vm154, %v147, %v151
    %v156 = vand.u32 2147483647, %v146
    %vm157 = vcmp.eq.f32.partialorder %v156, 8.507059e+37
    %v158 = vand.u32 %v146, 2147483648
    %v159 = vor.u32 1.1754944e-38, %v158
    %v160 = vsel %vm157, %v159, %v155
    %v161 = vmul.f32 1.0, %v160
    %163 = vrot.lane.b32.xlu0 %v161, 96
    %v164 = vpop.permute.xlu0 %163
    %v166 = vmul.f32 %v142, %v164
    %v167 = vld [vmem:[%s5] sm:$0x1]
    %v168 = vld [vmem:[%s6] sm:$0x1]
    %v169 = vmul.f32 %v161, 0.5
    %171 = vrot.lane.b32.xlu0 %v169, 32
    %v172 = vpop.permute.xlu0 %171
    %vm174 = vcmask 261120
    %175 = vst.msk [vmem:[#allocation9] sm:$0xff] %vm174, %v172
    %v176 = vrot.slane %v169, 1
    %v177 = vrot.slane %v169, 2
    %v178 = vrot.slane %v169, 3
    %v179 = vrot.slane %v169, 4
    %v180 = vrot.slane %v169, 5
    %v181 = vrot.slane %v169, 6
    %v182 = vrot.slane %v169, 7
    %v183 = vperm.slane %v169, 0
    %v184 = vperm.slane %v176, 0
    %v185 = vperm.slane %v177, 0
    %v186 = vperm.slane %v178, 0
    %v187 = vperm.slane %v179, 0
    %v188 = vperm.slane %v180, 0
    %v189 = vperm.slane %v181, 0
    %v190 = vperm.slane %v182, 0
    %191 = vrot.lane.b32.xlu0 %v183, 32
    %v192 = vpop.permute.xlu0 %191
    %193 = vrot.lane.b32.xlu0 %v184, 32
    %v194 = vpop.permute.xlu0 %193
    %195 = vrot.lane.b32.xlu0 %v185, 32
    %v196 = vpop.permute.xlu0 %195
    %197 = vrot.lane.b32.xlu0 %v186, 32
    %v198 = vpop.permute.xlu0 %197
    %199 = vrot.lane.b32.xlu0 %v187, 32
    %v200 = vpop.permute.xlu0 %199
    %201 = vrot.lane.b32.xlu0 %v188, 32
    %v202 = vpop.permute.xlu0 %201
    %203 = vrot.lane.b32.xlu0 %v189, 32
    %v204 = vpop.permute.xlu0 %203
    %205 = vrot.lane.b32.xlu0 %v190, 32
    %v206 = vpop.permute.xlu0 %205
    %v215 = vmul.f32 %v56, %v192
    %v216 = vmul.f32 %v57, %v194
    %v217 = vmul.f32 %v58, %v196
    %v218 = vmul.f32 %v59, %v198
    %v219 = vmul.f32 %v60, %v200
    %v220 = vmul.f32 %v61, %v202
    %v221 = vmul.f32 %v62, %v204
    %v222 = vmul.f32 %v63, %v206
    %v223 = vsel %vm174, %v215, 0.0
    %v224 = vsel %vm174, %v216, 0.0
    %v225 = vadd.f32 %v223, %v224
    %v226 = vsel %vm174, %v217, 0.0
    %v227 = vadd.f32 %v225, %v226
    %v228 = vsel %vm174, %v218, 0.0
    %v229 = vadd.f32 %v227, %v228
    %v230 = vsel %vm174, %v219, 0.0
    %v231 = vadd.f32 %v229, %v230
    %v232 = vsel %vm174, %v220, 0.0
    %v233 = vadd.f32 %v231, %v232
    %v234 = vsel %vm174, %v221, 0.0
    %v235 = vadd.f32 %v233, %v234
    %v236 = vsel %vm174, %v222, 0.0
    %v237 = vadd.f32 %v235, %v236
    %v238 = vsub.f32 0.0, %v237
    %v239 = vld [vmem:[%s4] sm:$0xff]
    %v240 = vld [vmem:[%s4 + $0x8] sm:$0xff]
    %v241 = vld [vmem:[%s4 + $0x10] sm:$0xff]
    %v242 = vld [vmem:[%s4 + $0x18] sm:$0xff]
    %v244 = vsel %vm174, %v238, 0
    %246 = vmatpush.msra.mxu0 0.0
    %247 = vmatpush.msra.mxu0 0.0
    %248 = vmatpush.msra.mxu0 0.0
    %249 = vmatpush.msra.mxu0 0.0
    %250 = vmatpush.msra.mxu0 0.0
    %251 = vmatpush.msra.mxu0 0.0
    %252 = vmatpush.msra.mxu0 0.0
    %253 = vmatpush.msra.mxu0 0.0
    %254 = vmatpush.msra.mxu0 0.0
    %255 = vmatpush.msra.mxu0 0.0
    %256 = vmatpush.msra.mxu0 0.0
    %257 = vmatpush.msra.mxu0 0.0
    %258 = vmatpush.msra.mxu0 %v242
    %259 = vmatpush.msra.mxu0 %v241
    %260 = vmatpush.msra.mxu0 %v240
    %261 = vmatpush.msra.mxu0 %v239
    %262 = vmatmul.f32.gmra.mxu0 %v244
    %v263 = vpop.f32.mrf.mxu0
    %v264 = vadd.f32 0.0, %v263
    %265 = vdwg.mxu0
    %v266 = vsel %vm174, %v264, 0.0
    %267 = vadd.xlane.f32.xlu0 %v266
    %v268 = vpop.xlane.xlu0 %267
    %v269 = vrcp.pop 32.0
    %v270 = vmul.f32 32.0, %v269
    %v271 = vsub.f32 1.0, %v270
    %v272 = vmul.f32 %v269, %v271
    %v273 = vadd.f32 %v269, %v272
    %vm274 = vweird.f32 %v269
    %v275 = vsel %vm274, %v269, %v273
    %v276 = vmul.f32 %v268, %v275
    %v277 = vsub.f32 %v264, %v276
    %v278 = vmul.f32 %v277, %v277
    %v279 = vsel %vm174, %v278, 0.0
    %280 = vadd.xlane.f32.xlu0 %v279
    %v281 = vpop.xlane.xlu0 %280
    %v282 = vmul.f32 %v281, %v275
    %v283 = vadd.f32 %v282, 32.0
    %v284 = vrsqrt.pop %v283
    %v285 = vmul.f32 %v284, %v283
    %v286 = vmul.f32 %v285, %v284
    %v287 = vmul.f32 0.5, %v286
    %v288 = vsub.f32 1.5, %v287
    %v289 = vmul.f32 %v284, %v288
    %vm290 = vweird.f32 %v283
    %vm291 = vweird.f32 %v284
    %vm292 = vmor %vm290, %vm291
    %v293 = vsel %vm292, %v284, %v289
    %v294 = vmul.f32 %v277, %v293
    %v296 = vperm.slane %v167, 0
    %v298 = vmul.f32 %v294, %v296
    %v299 = vadd.f32 %v298, 0.0
    %v301 = vperm.slane %v168, 0
    %v303 = vadd.f32 %v299, %v301
    %v304 = vxor.u32 %v140, 2147483648
    %v305 = vmul.f32 %v304, 1.442695
    %v306 = vpow.pop %v305
    %v307 = vadd.f32 %v306, 1.0
    %v308 = vrcp.pop %v307
    %v309 = vmul.f32 %v307, %v308
    %v310 = vsub.f32 1.0, %v309
    %v311 = vmul.f32 %v308, %v310
    %v312 = vadd.f32 %v308, %v311
    %vm313 = vweird.f32 %v307
    %vm314 = vweird.f32 %v308
    %vm315 = vmor %vm313, %vm314
    %v316 = vsel %vm315, %v308, %v312
    %v317 = vand.u32 2147483647, %v307
    %vm318 = vcmp.eq.f32.partialorder %v317, 8.507059e+37
    %v319 = vand.u32 %v307, 2147483648
    %v320 = vor.u32 1.1754944e-38, %v319
    %v321 = vsel %vm318, %v320, %v316
    %v322 = vmul.f32 1.0, %v321
    %v323 = vmul.f32 %v322, 0.5
    %s324 = scalar_lea.vmem [#allocation9], 8
    %325 = vst.msk [vmem:[%s324] sm:$0xff] %vm174, %v323
    %v327 = vrot.slane %v323, 1
    %v328 = vrot.slane %v323, 2
    %v329 = vrot.slane %v323, 3
    %v330 = vrot.slane %v323, 4
    %v331 = vrot.slane %v323, 5
    %v332 = vrot.slane %v323, 6
    %v333 = vrot.slane %v323, 7
    %v334 = vperm.slane %v323, 0
    %v335 = vperm.slane %v327, 0
    %v336 = vperm.slane %v328, 0
    %v337 = vperm.slane %v329, 0
    %v338 = vperm.slane %v330, 0
    %v339 = vperm.slane %v331, 0
    %v340 = vperm.slane %v332, 0
    %v341 = vperm.slane %v333, 0
    %v350 = vmul.f32 %v56, %v334
    %v351 = vmul.f32 %v57, %v335
    %v352 = vmul.f32 %v58, %v336
    %v353 = vmul.f32 %v59, %v337
    %v354 = vmul.f32 %v60, %v338
    %v355 = vmul.f32 %v61, %v339
    %v356 = vmul.f32 %v62, %v340
    %v357 = vmul.f32 %v63, %v341
    %v358 = vsel %vm174, %v350, 0.0
    %v359 = vsel %vm174, %v351, 0.0
    %v360 = vadd.f32 %v358, %v359
    %v361 = vsel %vm174, %v352, 0.0
    %v362 = vadd.f32 %v360, %v361
    %v363 = vsel %vm174, %v353, 0.0
    %v364 = vadd.f32 %v362, %v363
    %v365 = vsel %vm174, %v354, 0.0
    %v366 = vadd.f32 %v364, %v365
    %v367 = vsel %vm174, %v355, 0.0
    %v368 = vadd.f32 %v366, %v367
    %v369 = vsel %vm174, %v356, 0.0
    %v370 = vadd.f32 %v368, %v369
    %v371 = vsel %vm174, %v357, 0.0
    %v372 = vadd.f32 %v370, %v371
    %v373 = vsub.f32 0.0, %v372
    %s374 = scalar_lea.vmem %s4, 32
    %v375 = vld [vmem:[%s374] sm:$0xff]
    %v376 = vld [vmem:[%s374 + $0x8] sm:$0xff]
    %v377 = vld [vmem:[%s374 + $0x10] sm:$0xff]
    %v378 = vld [vmem:[%s374 + $0x18] sm:$0xff]
    %v380 = vsel %vm174, %v373, 0
    %382 = vmatpush.msra.mxu0 0.0
    %383 = vmatpush.msra.mxu0 0.0
    %384 = vmatpush.msra.mxu0 0.0
    %385 = vmatpush.msra.mxu0 0.0
    %386 = vmatpush.msra.mxu0 0.0
    %387 = vmatpush.msra.mxu0 0.0
    %388 = vmatpush.msra.mxu0 0.0
    %389 = vmatpush.msra.mxu0 0.0
    %390 = vmatpush.msra.mxu0 0.0
    %391 = vmatpush.msra.mxu0 0.0
    %392 = vmatpush.msra.mxu0 0.0
    %393 = vmatpush.msra.mxu0 0.0
    %394 = vmatpush.msra.mxu0 %v378
    %395 = vmatpush.msra.mxu0 %v377
    %396 = vmatpush.msra.mxu0 %v376
    %397 = vmatpush.msra.mxu0 %v375
    %398 = vmatmul.f32.gmra.mxu0 %v380
    %v399 = vpop.f32.mrf.mxu0
    %v400 = vadd.f32 0.0, %v399
    %401 = vdwg.mxu0
    %v402 = vsel %vm174, %v400, 0.0
    %403 = vadd.xlane.f32.xlu0 %v402
    %v404 = vpop.xlane.xlu0 %403
    %v405 = vmul.f32 %v404, %v275
    %v406 = vsub.f32 %v400, %v405
    %v407 = vmul.f32 %v406, %v406
    %v408 = vsel %vm174, %v407, 0.0
    %409 = vadd.xlane.f32.xlu0 %v408
    %v410 = vpop.xlane.xlu0 %409
    %v411 = vmul.f32 %v410, %v275
    %v412 = vadd.f32 %v411, 32.0
    %v413 = vrsqrt.pop %v412
    %v414 = vmul.f32 %v413, %v412
    %v415 = vmul.f32 %v414, %v413
    %v416 = vmul.f32 0.5, %v415
    %v417 = vsub.f32 1.5, %v416
    %v418 = vmul.f32 %v413, %v417
    %vm419 = vweird.f32 %v412
    %vm420 = vweird.f32 %v413
    %vm421 = vmor %vm419, %vm420
    %v422 = vsel %vm421, %v413, %v418
    %v423 = vmul.f32 %v406, %v422
    %v424 = vmul.f32 %v423, %v296
    %v425 = vadd.f32 %v303, %v424
    %v426 = vadd.f32 %v425, %v301
    %v427 = vadd.f32 %v426, %v166
    %v428 = vtanh.pop %v427
    %429 = vrot.lane.b32.xlu0 %v161, 64
    %v430 = vpop.permute.xlu0 %429
    %v432 = vmul.f32 %v428, %v430
    %v433 = vld [vmem:[%s7] sm:$0xff]
    %v434 = vld [vmem:[%s7 + $0x8] sm:$0xff]
    %v435 = vld [vmem:[%s7 + $0x10] sm:$0xff]
    %v436 = vld [vmem:[%s7 + $0x18] sm:$0xff]
    %v437 = vld [vmem:[%s8] sm:$0x1]
    %v439 = vperm.slane %v437, 0
    %v442 = vsel %vm174, %v432, 0
    %444 = vmatpush.msra.mxu0 0.0
    %445 = vmatpush.msra.mxu0 0.0
    %446 = vmatpush.msra.mxu0 0.0
    %447 = vmatpush.msra.mxu0 0.0
    %448 = vmatpush.msra.mxu0 0.0
    %449 = vmatpush.msra.mxu0 0.0
    %450 = vmatpush.msra.mxu0 0.0
    %451 = vmatpush.msra.mxu0 0.0
    %452 = vmatpush.msra.mxu0 0.0
    %453 = vmatpush.msra.mxu0 0.0
    %454 = vmatpush.msra.mxu0 0.0
    %455 = vmatpush.msra.mxu0 0.0
    %456 = vmatpush.msra.mxu0 %v436
    %457 = vmatpush.msra.mxu0 %v435
    %458 = vmatpush.msra.mxu0 %v434
    %459 = vmatpush.msra.mxu0 %v433
    %460 = vmatmul.f32.gmra.mxu0 %v442
    %v461 = vpop.f32.mrf.mxu0
    %v462 = vadd.f32 %v439, %v461
    %463 = vdwg.mxu0
    %vm464 = vcmask 64512
    %465 = vst.msk [vmem:[#allocation5] sm:$0xff] %vm464, %v462
    %466 = vst.msk [vmem:[#allocation6] sm:$0xff] %vm174, %v432
    %467 = vst.msk [vmem:[#allocation8] sm:$0xff] %vm174, %v57
    %468 = vst.msk [vmem:[#allocation8 + $0x8] sm:$0xff] %vm174, %v58
    %469 = vst.msk [vmem:[#allocation8 + $0x10] sm:$0xff] %vm174, %v59
    %470 = vst.msk [vmem:[#allocation8 + $0x18] sm:$0xff] %vm174, %v60
    %471 = vst.msk [vmem:[#allocation8 + $0x20] sm:$0xff] %vm174, %v61
    %472 = vst.msk [vmem:[#allocation8 + $0x28] sm:$0xff] %vm174, %v62
    %473 = vst.msk [vmem:[#allocation8 + $0x30] sm:$0xff] %vm174, %v63
    %s474 = scalar_lea.vmem [#allocation8], 56
    %475 = vst.msk [vmem:[%s474] sm:$0xff] %vm174, %v427
    // Predicated region
    $region42: #{tpu_custom_call.1} parent=1 // pred_check
      _
    $region43: #{tpu_custom_call.1} parent=1 // pred_check_branch
      %477 = sbr.rel (0) target = $region45
    $region44: #{tpu_custom_call.1} parent=1 // pred_region
      %479 = vsyncadd [#allocation4], 0
      %s481 = sshll.u32 [#allocation5], 4
      %s482 = int_to_ptr.vmem [resolvable:$true] %s481
      %s483 = sshll.u32 %s9, 4
      %s484 = int_to_ptr.hbm [resolvable:$true] %s483
      %486 = dma.vmem_to_hbm [thread:$0]  %s482, 128, %s484, [#allocation4]
    $region45: #{tpu_custom_call.1} parent=1 // pred_fallthru
      _
    // Predicated region
    $region46: #{tpu_custom_call.1} parent=1 // pred_check
      _
    $region47: #{tpu_custom_call.1} parent=1 // pred_check_branch
      %488 = sbr.rel (0) target = $region49
    $region48: #{tpu_custom_call.1} parent=1 // pred_region
      %490 = vsyncadd [#allocation7], 0
      %s492 = sshll.u32 [#allocation6], 4
      %s493 = int_to_ptr.vmem [resolvable:$true] %s492
      %s494 = sshll.u32 %s10, 4
      %s495 = int_to_ptr.hbm [resolvable:$true] %s494
      %497 = dma.vmem_to_hbm [thread:$0]  %s493, 128, %s495, [#allocation7]
    $region49: #{tpu_custom_call.1} parent=1 // pred_fallthru
      _
    // Predicated region
    $region50: #{tpu_custom_call.1} parent=1 // pred_check
      _
    $region51: #{tpu_custom_call.1} parent=1 // pred_check_branch
      %499 = sbr.rel (0) target = $region53
    $region52: #{tpu_custom_call.1} parent=1 // pred_region
      %501 = vsyncadd [#allocation7], 0
      %s502 = sshll.u32 [#allocation8], 4
      %s503 = int_to_ptr.vmem [resolvable:$true] %s502
      %s504 = sshll.u32 %s11, 4
      %s505 = int_to_ptr.hbm [resolvable:$true] %s504
      %510 = dma.vmem_to_hbm [thread:$0]  %s503, 1024, %s505, [#allocation7], 128, 128, 8
    $region53: #{tpu_custom_call.1} parent=1 // pred_fallthru
      _
    // Predicated region
    $region54: #{tpu_custom_call.1} parent=1 // pred_check
      _
    $region55: #{tpu_custom_call.1} parent=1 // pred_check_branch
      %512 = sbr.rel (0) target = $region57
    $region56: #{tpu_custom_call.1} parent=1 // pred_region
      %514 = vsyncadd [#allocation10], 0
      %s515 = sshll.u32 [#allocation9], 4
      %s516 = int_to_ptr.vmem [resolvable:$true] %s515
      %s517 = sshll.u32 %s12, 4
      %s518 = int_to_ptr.hbm [resolvable:$true] %s517
      %523 = dma.vmem_to_hbm [thread:$0]  %s516, 256, %s518, [#allocation10], 128, 128, 8
    $region57: #{tpu_custom_call.1} parent=1 // pred_fallthru
      _
    // Predicated region
    $region58: #{tpu_custom_call.1} parent=1 // pred_check
      _
    $region59: #{tpu_custom_call.1} parent=1 // pred_check_branch
      %525 = sbr.rel (0) target = $region61
    $region60: #{tpu_custom_call.1} parent=1 // pred_region
      %527 = dma.done [#allocation4], 128
    $region61: #{tpu_custom_call.1} parent=1 // pred_fallthru
      _
    // Predicated region
    $region62: #{tpu_custom_call.1} parent=1 // pred_check
      _
    $region63: #{tpu_custom_call.1} parent=1 // pred_check_branch
      %529 = sbr.rel (0) target = $region65
    $region64: #{tpu_custom_call.1} parent=1 // pred_region
      %531 = dma.done [#allocation7], 128
    $region65: #{tpu_custom_call.1} parent=1 // pred_fallthru
      _
    // Predicated region
    $region66: #{tpu_custom_call.1} parent=1 // pred_check
      _
    $region67: #{tpu_custom_call.1} parent=1 // pred_check_branch
      %533 = sbr.rel (0) target = $region69
    $region68: #{tpu_custom_call.1} parent=1 // pred_region
      %535 = dma.done [#allocation7], 1024
    $region69: #{tpu_custom_call.1} parent=1 // pred_fallthru
      _
    // Predicated region
    $region70: #{tpu_custom_call.1} parent=1 // pred_check
      _
    $region71: #{tpu_custom_call.1} parent=1 // pred_check_branch
      %537 = sbr.rel (0) target = $region73
    $region72: #{tpu_custom_call.1} parent=1 // pred_region
      %539 = dma.done [#allocation10], 256
    $region73: #{tpu_custom_call.1} parent=1 // pred_fallthru
      _
    %540 = vsyncpa [#allocation3], 1
    %541 = vsyncpa [#allocation4], 1
    %542 = vsyncpa [#allocation7], 1
    %543 = vsyncpa [#allocation10], 1

</llo_original>
